<compile_context>
chip_gen: v7x
topology: tpu7x:2x2x1
jax: 0.10.0
libtpu: 0.0.40
codegen_flags: <defaults>
</compile_context>

<pallas_src>
import functools

import jax
import jax.numpy as jnp
import numpy as np
from jax.experimental import pallas as pl
from jax.experimental.pallas import tpu as pltpu


def _im2col_patches(x, mask_ref, H, W):
    """Build the (9*C, H*W) im2col patch matrix for a 3x3 'same' conv.

    x is (C, H*W) with spatial flattened into lanes.  The tap at offset
    (dy, dx) is a lane-roll of x by -(dy*W + dx) (pltpu.roll, XLU slot),
    multiplied by a precomputed 0/1 border mask so out-of-image taps read 0.
    """
    HW = x.shape[-1]
    pieces = []
    t = 0
    for dy in (-1, 0, 1):
        for dx in (-1, 0, 1):
            d = dy * W + dx
            piece = x if d == 0 else pltpu.roll(x, (-d) % HW, 1)
            if not (dy == 0 and dx == 0):
                piece = piece * mask_ref[t]      # (1, HW) broadcasts over C
            pieces.append(piece)
            t += 1
    return jnp.concatenate(pieces, axis=0)       # (9*C, HW)


def cnnblocks_kernel(x_ref, w1_ref, b1_ref, w2_ref, b2_ref, alpha_ref,
                     mask_ref, out_ref, *, H, W):
    # x_ref   : (nb, C, H*W)   flattened NCHW activations (f32)
    # w*_ref  : (C, 9*C)       im2col-flattened conv weights (tap-major, then c_in)
    # b*_ref  : (C, 1)         biases (broadcast over lanes)
    # alpha_ref: (1, 1)        PReLU single shared slope
    # mask_ref: (9, 1, H*W)    0/1 border masks for the 9 taps
    # out_ref : (nb, C, H*W)   lane-dense output slab
    nb = x_ref.shape[0]
    w1 = w1_ref[...]
    b1 = b1_ref[...]
    w2 = w2_ref[...]
    b2 = b2_ref[...]
    alpha = alpha_ref[...]

    for b in range(nb):
        x = x_ref[b]                                                 # (C, HW)

        # conv1 (single im2col matmul, K = 9*C) + bias
        p1 = _im2col_patches(x, mask_ref, H, W)                      # (9C, HW)
        h = jnp.dot(w1, p1, preferred_element_type=jnp.float32) + b1

        # PReLU (single shared parameter)
        h = jnp.where(h > 0, h, alpha * h)

        # conv2 + bias, residual add with the unpadded input
        p2 = _im2col_patches(h, mask_ref, H, W)
        y = jnp.dot(w2, p2, preferred_element_type=jnp.float32) + b2
        out_ref[b] = (y + x).astype(out_ref.dtype)


def _pick_nb(n):
    """Batch elements per grid step: amortize the ~0.35us step overhead while
    keeping >=2 grid steps when possible (megacore sharding on v7x)."""
    target = max(1, n // 2)
    for cand in range(target, 0, -1):
        if n % cand == 0:
            return cand
    return 1


def _border_masks(H, W):
    """(9, 1, H*W) 0/1 masks: mask[t] is 1 where tap t reads inside the image."""
    masks = np.ones((9, 1, H * W), np.float32)
    t = 0
    for dy in (-1, 0, 1):
        for dx in (-1, 0, 1):
            m = np.ones((H, W), np.float32)
            if dy == -1:
                m[0, :] = 0.0
            if dy == 1:
                m[H - 1, :] = 0.0
            if dx == -1:
                m[:, 0] = 0.0
            if dx == 1:
                m[:, W - 1] = 0.0
            masks[t, 0] = m.reshape(H * W)
            t += 1
    return jnp.asarray(masks)


def cnnblocks_forward(x_nchw, w1, b1, alpha, w2, b2, *, nb=None):
    """PyTorch-equivalent forward: conv(conv(x)->prelu) + x, NCHW in/out."""
    N, C, H, W = x_nchw.shape
    HW = H * W
    if nb is None:
        nb = _pick_nb(N)

    # Layout plumbing only (no pre-pad, no NHWC transpose):
    x_flat = x_nchw.reshape(N, C, HW).astype(jnp.float32)

    # OIHW -> (O, KH, KW, I) -> (O, 9*I): column (ky*3+kx)*C + c_in matches the
    # tap-major ordering produced by _im2col_patches.
    w1_flat = jnp.transpose(w1, (0, 2, 3, 1)).reshape(C, 9 * C).astype(jnp.float32)
    w2_flat = jnp.transpose(w2, (0, 2, 3, 1)).reshape(C, 9 * C).astype(jnp.float32)
    b1r = b1.reshape(C, 1).astype(jnp.float32)
    b2r = b2.reshape(C, 1).astype(jnp.float32)
    alpha_r = jnp.asarray(alpha, jnp.float32).reshape(1, 1)
    masks = _border_masks(H, W)

    kernel = functools.partial(cnnblocks_kernel, H=H, W=W)

    # VMEM per step: ~2 * nb * C * HW * 4B for x/out (double-buffered) plus a few KB
    # of weights/masks -- far below the 32 MiB default scoped limit on all of
    # v5e/v6e/v7x at these sizes, so no vmem_limit_bytes override is needed.
    out_flat = pl.pallas_call(
        kernel,
        out_shape=jax.ShapeDtypeStruct((N, C, HW), jnp.float32),
        grid_spec=pltpu.PrefetchScalarGridSpec(
            num_scalar_prefetch=0,
            grid=(N // nb,),
            in_specs=[
                pl.BlockSpec((nb, C, HW), lambda n: (n, 0, 0)),
                pl.BlockSpec((C, 9 * C), lambda n: (0, 0)),
                pl.BlockSpec((C, 1), lambda n: (0, 0)),
                pl.BlockSpec((C, 9 * C), lambda n: (0, 0)),
                pl.BlockSpec((C, 1), lambda n: (0, 0)),
                pl.BlockSpec((1, 1), lambda n: (0, 0)),
                pl.BlockSpec((9, 1, HW), lambda n: (0, 0, 0)),
            ],
            out_specs=pl.BlockSpec((nb, C, HW), lambda n: (n, 0, 0)),
        ),
        # Batch axis is embarrassingly parallel -> shard across TCs on v7x.
        compiler_params=pltpu.CompilerParams(
            dimension_semantics=("parallel",)),
    )(x_flat, w1_flat, b1r, w2_flat, b2r, alpha_r, masks)

    return out_flat.reshape(N, C, H, W)


def cnnblocks_ref(x_nchw, w1, b1, alpha, w2, b2):
    """Pure-JAX reference matching torch semantics (for verification)."""
    dn = ('NCHW', 'OIHW', 'NCHW')

    def conv(x, w, b):
        return jax.lax.conv_general_dilated(
            x, w, window_strides=(1, 1), padding='SAME',
            dimension_numbers=dn) + b.reshape(1, -1, 1, 1)

    h = conv(x_nchw, w1, b1)
    h = jnp.where(h > 0, h, alpha * h)          # PReLU, single parameter
    return conv(h, w2, b2) + x_nchw


if __name__ == "__main__":
    key = jax.random.PRNGKey(0)
    k1, k2, k3, k4, k5 = jax.random.split(key, 5)

    N, C, H, W = 2, 4, 16, 16
    x = jax.random.normal(k1, (N, C, H, W), jnp.float32)

    # Shapes from nn.Conv2d(C, C, 3, 1, 1) x2 + nn.PReLU() (single parameter).
    w1 = jax.random.normal(k2, (C, C, 3, 3), jnp.float32) * 0.1
    b1 = jax.random.normal(k3, (C,), jnp.float32) * 0.1
    w2 = jax.random.normal(k4, (C, C, 3, 3), jnp.float32) * 0.1
    b2 = jax.random.normal(k5, (C,), jnp.float32) * 0.1
    alpha = jnp.float32(0.25)                   # PReLU default init

    out = cnnblocks_forward(x, w1, b1, alpha, w2, b2)
    out = jax.block_until_ready(out)

    ref = cnnblocks_ref(x, w1, b1, alpha, w2, b2)
    assert out.shape == (N, C, H, W)
    np.testing.assert_allclose(np.asarray(out), np.asarray(ref),
                               rtol=1e-4, atol=1e-4)
    print("KERNEL_OK")
</pallas_src>

<mosaic_0001>
module attributes {stable_mosaic.version = 11 : i64} {
  func.func @cnnblocks_kernel(%arg0: i32, %arg1: memref<1x4x256xf32, #tpu.memory_space<vmem>>, %arg2: memref<4x36xf32, #tpu.memory_space<vmem>>, %arg3: memref<4x1xf32, #tpu.memory_space<vmem>>, %arg4: memref<4x36xf32, #tpu.memory_space<vmem>>, %arg5: memref<4x1xf32, #tpu.memory_space<vmem>>, %arg6: memref<1x1xf32, #tpu.memory_space<vmem>>, %arg7: memref<9x1x256xf32, #tpu.memory_space<vmem>>, %arg8: memref<1x4x256xf32, #tpu.memory_space<vmem>>) attributes {dimension_semantics = [#tpu.dimension_semantics<parallel>], iteration_bounds = array<i64: 2>, scalar_prefetch = 0 : i64, scratch_operands = 0 : i64, tpu.core_type = #tpu.core_type<tc>, window_params = [{transform_indices = @transform_0, window_bounds = array<i64: 1, 4, 256>}, {pipeline_mode = #tpu.pipeline_mode<synchronous>, transform_indices = @transform_1, window_bounds = array<i64: 4, 36>}, {pipeline_mode = #tpu.pipeline_mode<synchronous>, transform_indices = @transform_2, window_bounds = array<i64: 4, 1>}, {pipeline_mode = #tpu.pipeline_mode<synchronous>, transform_indices = @transform_3, window_bounds = array<i64: 4, 36>}, {pipeline_mode = #tpu.pipeline_mode<synchronous>, transform_indices = @transform_4, window_bounds = array<i64: 4, 1>}, {pipeline_mode = #tpu.pipeline_mode<synchronous>, transform_indices = @transform_5, window_bounds = array<i64: 1, 1>}, {pipeline_mode = #tpu.pipeline_mode<synchronous>, transform_indices = @transform_6, window_bounds = array<i64: 9, 1, 256>}, {transform_indices = @transform_7, window_bounds = array<i64: 1, 4, 256>}]} {
    %c0 = arith.constant 0 : index
    %c0_0 = arith.constant 0 : index
    %0 = vector.load %arg2[%c0, %c0_0] : memref<4x36xf32, #tpu.memory_space<vmem>>, vector<4x36xf32>
    %c0_1 = arith.constant 0 : index
    %c0_2 = arith.constant 0 : index
    %1 = vector.load %arg3[%c0_1, %c0_2] : memref<4x1xf32, #tpu.memory_space<vmem>>, vector<4x1xf32>
    %c0_3 = arith.constant 0 : index
    %c0_4 = arith.constant 0 : index
    %2 = vector.load %arg4[%c0_3, %c0_4] : memref<4x36xf32, #tpu.memory_space<vmem>>, vector<4x36xf32>
    %c0_5 = arith.constant 0 : index
    %c0_6 = arith.constant 0 : index
    %3 = vector.load %arg5[%c0_5, %c0_6] : memref<4x1xf32, #tpu.memory_space<vmem>>, vector<4x1xf32>
    %c0_7 = arith.constant 0 : index
    %c0_8 = arith.constant 0 : index
    %4 = vector.load %arg6[%c0_7, %c0_8] : memref<1x1xf32, #tpu.memory_space<vmem>>, vector<1x1xf32>
    %c0_9 = arith.constant 0 : index
    %c0_10 = arith.constant 0 : index
    %c0_11 = arith.constant 0 : index
    %5 = vector.load %arg1[%c0_9, %c0_10, %c0_11] : memref<1x4x256xf32, #tpu.memory_space<vmem>>, vector<1x4x256xf32>
    %6 = vector.shape_cast %5 : vector<1x4x256xf32> to vector<4x256xf32>
    %c17_i32 = arith.constant 17 : i32
    %7 = tpu.dynamic_rotate %6 by %c17_i32 dim 1 : vector<4x256xf32>, i32 -> vector<4x256xf32>
    %c0_12 = arith.constant 0 : index
    %c0_13 = arith.constant 0 : index
    %c0_14 = arith.constant 0 : index
    %8 = vector.load %arg7[%c0_12, %c0_13, %c0_14] : memref<9x1x256xf32, #tpu.memory_space<vmem>>, vector<1x1x256xf32>
    %9 = vector.shape_cast %8 : vector<1x1x256xf32> to vector<1x256xf32>
    %10 = vector.broadcast %9 : vector<1x256xf32> to vector<4x256xf32>
    %11 = arith.mulf %7, %10 : vector<4x256xf32>
    %c16_i32 = arith.constant 16 : i32
    %12 = tpu.dynamic_rotate %6 by %c16_i32 dim 1 : vector<4x256xf32>, i32 -> vector<4x256xf32>
    %c1 = arith.constant 1 : index
    %c0_15 = arith.constant 0 : index
    %c0_16 = arith.constant 0 : index
    %13 = vector.load %arg7[%c1, %c0_15, %c0_16] : memref<9x1x256xf32, #tpu.memory_space<vmem>>, vector<1x1x256xf32>
    %14 = vector.shape_cast %13 : vector<1x1x256xf32> to vector<1x256xf32>
    %15 = vector.broadcast %14 : vector<1x256xf32> to vector<4x256xf32>
    %16 = arith.mulf %12, %15 : vector<4x256xf32>
    %c15_i32 = arith.constant 15 : i32
    %17 = tpu.dynamic_rotate %6 by %c15_i32 dim 1 : vector<4x256xf32>, i32 -> vector<4x256xf32>
    %c2 = arith.constant 2 : index
    %c0_17 = arith.constant 0 : index
    %c0_18 = arith.constant 0 : index
    %18 = vector.load %arg7[%c2, %c0_17, %c0_18] : memref<9x1x256xf32, #tpu.memory_space<vmem>>, vector<1x1x256xf32>
    %19 = vector.shape_cast %18 : vector<1x1x256xf32> to vector<1x256xf32>
    %20 = vector.broadcast %19 : vector<1x256xf32> to vector<4x256xf32>
    %21 = arith.mulf %17, %20 : vector<4x256xf32>
    %c1_i32 = arith.constant 1 : i32
    %22 = tpu.dynamic_rotate %6 by %c1_i32 dim 1 : vector<4x256xf32>, i32 -> vector<4x256xf32>
    %c3 = arith.constant 3 : index
    %c0_19 = arith.constant 0 : index
    %c0_20 = arith.constant 0 : index
    %23 = vector.load %arg7[%c3, %c0_19, %c0_20] : memref<9x1x256xf32, #tpu.memory_space<vmem>>, vector<1x1x256xf32>
    %24 = vector.shape_cast %23 : vector<1x1x256xf32> to vector<1x256xf32>
    %25 = vector.broadcast %24 : vector<1x256xf32> to vector<4x256xf32>
    %26 = arith.mulf %22, %25 : vector<4x256xf32>
    %c255_i32 = arith.constant 255 : i32
    %27 = tpu.dynamic_rotate %6 by %c255_i32 dim 1 : vector<4x256xf32>, i32 -> vector<4x256xf32>
    %c5 = arith.constant 5 : index
    %c0_21 = arith.constant 0 : index
    %c0_22 = arith.constant 0 : index
    %28 = vector.load %arg7[%c5, %c0_21, %c0_22] : memref<9x1x256xf32, #tpu.memory_space<vmem>>, vector<1x1x256xf32>
    %29 = vector.shape_cast %28 : vector<1x1x256xf32> to vector<1x256xf32>
    %30 = vector.broadcast %29 : vector<1x256xf32> to vector<4x256xf32>
    %31 = arith.mulf %27, %30 : vector<4x256xf32>
    %c241_i32 = arith.constant 241 : i32
    %32 = tpu.dynamic_rotate %6 by %c241_i32 dim 1 : vector<4x256xf32>, i32 -> vector<4x256xf32>
    %c6 = arith.constant 6 : index
    %c0_23 = arith.constant 0 : index
    %c0_24 = arith.constant 0 : index
    %33 = vector.load %arg7[%c6, %c0_23, %c0_24] : memref<9x1x256xf32, #tpu.memory_space<vmem>>, vector<1x1x256xf32>
    %34 = vector.shape_cast %33 : vector<1x1x256xf32> to vector<1x256xf32>
    %35 = vector.broadcast %34 : vector<1x256xf32> to vector<4x256xf32>
    %36 = arith.mulf %32, %35 : vector<4x256xf32>
    %c240_i32 = arith.constant 240 : i32
    %37 = tpu.dynamic_rotate %6 by %c240_i32 dim 1 : vector<4x256xf32>, i32 -> vector<4x256xf32>
    %c7 = arith.constant 7 : index
    %c0_25 = arith.constant 0 : index
    %c0_26 = arith.constant 0 : index
    %38 = vector.load %arg7[%c7, %c0_25, %c0_26] : memref<9x1x256xf32, #tpu.memory_space<vmem>>, vector<1x1x256xf32>
    %39 = vector.shape_cast %38 : vector<1x1x256xf32> to vector<1x256xf32>
    %40 = vector.broadcast %39 : vector<1x256xf32> to vector<4x256xf32>
    %41 = arith.mulf %37, %40 : vector<4x256xf32>
    %c239_i32 = arith.constant 239 : i32
    %42 = tpu.dynamic_rotate %6 by %c239_i32 dim 1 : vector<4x256xf32>, i32 -> vector<4x256xf32>
    %c8 = arith.constant 8 : index
    %c0_27 = arith.constant 0 : index
    %c0_28 = arith.constant 0 : index
    %43 = vector.load %arg7[%c8, %c0_27, %c0_28] : memref<9x1x256xf32, #tpu.memory_space<vmem>>, vector<1x1x256xf32>
    %44 = vector.shape_cast %43 : vector<1x1x256xf32> to vector<1x256xf32>
    %45 = vector.broadcast %44 : vector<1x256xf32> to vector<4x256xf32>
    %46 = arith.mulf %42, %45 : vector<4x256xf32>
    %47 = tpu.concatenate %11, %16, %21, %26, %6, %31, %36, %41, %46 in 0 : vector<4x256xf32>, vector<4x256xf32>, vector<4x256xf32>, vector<4x256xf32>, vector<4x256xf32>, vector<4x256xf32>, vector<4x256xf32>, vector<4x256xf32>, vector<4x256xf32> -> vector<36x256xf32>
    %cst = arith.constant dense<0.000000e+00> : vector<4x256xf32>
    %48 = tpu.matmul %0, %47, %cst {dimension_numbers = #tpu.dot_dimension_numbers<[1], [0], [0], [1], [0, 0, 1, 1], [], []>} : vector<4x36xf32>, vector<36x256xf32>, vector<4x256xf32> -> vector<4x256xf32>
    %49 = vector.broadcast %1 : vector<4x1xf32> to vector<4x256xf32>
    %50 = arith.addf %48, %49 : vector<4x256xf32>
    %cst_29 = arith.constant 0.000000e+00 : f32
    %51 = vector.broadcast %cst_29 : f32 to vector<4x256xf32>
    %52 = arith.cmpf ogt, %50, %51 : vector<4x256xf32>
    %53 = vector.broadcast %4 : vector<1x1xf32> to vector<4x256xf32>
    %54 = arith.mulf %53, %50 : vector<4x256xf32>
    %55 = arith.select %52, %50, %54 : vector<4x256xi1>, vector<4x256xf32>
    %c17_i32_30 = arith.constant 17 : i32
    %56 = tpu.dynamic_rotate %55 by %c17_i32_30 dim 1 : vector<4x256xf32>, i32 -> vector<4x256xf32>
    %c0_31 = arith.constant 0 : index
    %c0_32 = arith.constant 0 : index
    %c0_33 = arith.constant 0 : index
    %57 = vector.load %arg7[%c0_31, %c0_32, %c0_33] : memref<9x1x256xf32, #tpu.memory_space<vmem>>, vector<1x1x256xf32>
    %58 = vector.shape_cast %57 : vector<1x1x256xf32> to vector<1x256xf32>
    %59 = vector.broadcast %58 : vector<1x256xf32> to vector<4x256xf32>
    %60 = arith.mulf %56, %59 : vector<4x256xf32>
    %c16_i32_34 = arith.constant 16 : i32
    %61 = tpu.dynamic_rotate %55 by %c16_i32_34 dim 1 : vector<4x256xf32>, i32 -> vector<4x256xf32>
    %c1_35 = arith.constant 1 : index
    %c0_36 = arith.constant 0 : index
    %c0_37 = arith.constant 0 : index
    %62 = vector.load %arg7[%c1_35, %c0_36, %c0_37] : memref<9x1x256xf32, #tpu.memory_space<vmem>>, vector<1x1x256xf32>
    %63 = vector.shape_cast %62 : vector<1x1x256xf32> to vector<1x256xf32>
    %64 = vector.broadcast %63 : vector<1x256xf32> to vector<4x256xf32>
    %65 = arith.mulf %61, %64 : vector<4x256xf32>
    %c15_i32_38 = arith.constant 15 : i32
    %66 = tpu.dynamic_rotate %55 by %c15_i32_38 dim 1 : vector<4x256xf32>, i32 -> vector<4x256xf32>
    %c2_39 = arith.constant 2 : index
    %c0_40 = arith.constant 0 : index
    %c0_41 = arith.constant 0 : index
    %67 = vector.load %arg7[%c2_39, %c0_40, %c0_41] : memref<9x1x256xf32, #tpu.memory_space<vmem>>, vector<1x1x256xf32>
    %68 = vector.shape_cast %67 : vector<1x1x256xf32> to vector<1x256xf32>
    %69 = vector.broadcast %68 : vector<1x256xf32> to vector<4x256xf32>
    %70 = arith.mulf %66, %69 : vector<4x256xf32>
    %c1_i32_42 = arith.constant 1 : i32
    %71 = tpu.dynamic_rotate %55 by %c1_i32_42 dim 1 : vector<4x256xf32>, i32 -> vector<4x256xf32>
    %c3_43 = arith.constant 3 : index
    %c0_44 = arith.constant 0 : index
    %c0_45 = arith.constant 0 : index
    %72 = vector.load %arg7[%c3_43, %c0_44, %c0_45] : memref<9x1x256xf32, #tpu.memory_space<vmem>>, vector<1x1x256xf32>
    %73 = vector.shape_cast %72 : vector<1x1x256xf32> to vector<1x256xf32>
    %74 = vector.broadcast %73 : vector<1x256xf32> to vector<4x256xf32>
    %75 = arith.mulf %71, %74 : vector<4x256xf32>
    %c255_i32_46 = arith.constant 255 : i32
    %76 = tpu.dynamic_rotate %55 by %c255_i32_46 dim 1 : vector<4x256xf32>, i32 -> vector<4x256xf32>
    %c5_47 = arith.constant 5 : index
    %c0_48 = arith.constant 0 : index
    %c0_49 = arith.constant 0 : index
    %77 = vector.load %arg7[%c5_47, %c0_48, %c0_49] : memref<9x1x256xf32, #tpu.memory_space<vmem>>, vector<1x1x256xf32>
    %78 = vector.shape_cast %77 : vector<1x1x256xf32> to vector<1x256xf32>
    %79 = vector.broadcast %78 : vector<1x256xf32> to vector<4x256xf32>
    %80 = arith.mulf %76, %79 : vector<4x256xf32>
    %c241_i32_50 = arith.constant 241 : i32
    %81 = tpu.dynamic_rotate %55 by %c241_i32_50 dim 1 : vector<4x256xf32>, i32 -> vector<4x256xf32>
    %c6_51 = arith.constant 6 : index
    %c0_52 = arith.constant 0 : index
    %c0_53 = arith.constant 0 : index
    %82 = vector.load %arg7[%c6_51, %c0_52, %c0_53] : memref<9x1x256xf32, #tpu.memory_space<vmem>>, vector<1x1x256xf32>
    %83 = vector.shape_cast %82 : vector<1x1x256xf32> to vector<1x256xf32>
    %84 = vector.broadcast %83 : vector<1x256xf32> to vector<4x256xf32>
    %85 = arith.mulf %81, %84 : vector<4x256xf32>
    %c240_i32_54 = arith.constant 240 : i32
    %86 = tpu.dynamic_rotate %55 by %c240_i32_54 dim 1 : vector<4x256xf32>, i32 -> vector<4x256xf32>
    %c7_55 = arith.constant 7 : index
    %c0_56 = arith.constant 0 : index
    %c0_57 = arith.constant 0 : index
    %87 = vector.load %arg7[%c7_55, %c0_56, %c0_57] : memref<9x1x256xf32, #tpu.memory_space<vmem>>, vector<1x1x256xf32>
    %88 = vector.shape_cast %87 : vector<1x1x256xf32> to vector<1x256xf32>
    %89 = vector.broadcast %88 : vector<1x256xf32> to vector<4x256xf32>
    %90 = arith.mulf %86, %89 : vector<4x256xf32>
    %c239_i32_58 = arith.constant 239 : i32
    %91 = tpu.dynamic_rotate %55 by %c239_i32_58 dim 1 : vector<4x256xf32>, i32 -> vector<4x256xf32>
    %c8_59 = arith.constant 8 : index
    %c0_60 = arith.constant 0 : index
    %c0_61 = arith.constant 0 : index
    %92 = vector.load %arg7[%c8_59, %c0_60, %c0_61] : memref<9x1x256xf32, #tpu.memory_space<vmem>>, vector<1x1x256xf32>
    %93 = vector.shape_cast %92 : vector<1x1x256xf32> to vector<1x256xf32>
    %94 = vector.broadcast %93 : vector<1x256xf32> to vector<4x256xf32>
    %95 = arith.mulf %91, %94 : vector<4x256xf32>
    %96 = tpu.concatenate %60, %65, %70, %75, %55, %80, %85, %90, %95 in 0 : vector<4x256xf32>, vector<4x256xf32>, vector<4x256xf32>, vector<4x256xf32>, vector<4x256xf32>, vector<4x256xf32>, vector<4x256xf32>, vector<4x256xf32>, vector<4x256xf32> -> vector<36x256xf32>
    %cst_62 = arith.constant dense<0.000000e+00> : vector<4x256xf32>
    %97 = tpu.matmul %2, %96, %cst_62 {dimension_numbers = #tpu.dot_dimension_numbers<[1], [0], [0], [1], [0, 0, 1, 1], [], []>} : vector<4x36xf32>, vector<36x256xf32>, vector<4x256xf32> -> vector<4x256xf32>
    %98 = vector.broadcast %3 : vector<4x1xf32> to vector<4x256xf32>
    %99 = arith.addf %97, %98 : vector<4x256xf32>
    %100 = arith.addf %99, %6 : vector<4x256xf32>
    %c0_63 = arith.constant 0 : index
    %c0_64 = arith.constant 0 : index
    %c0_65 = arith.constant 0 : index
    %101 = vector.load %arg8[%c0_63, %c0_64, %c0_65] : memref<1x4x256xf32, #tpu.memory_space<vmem>>, vector<1x4x256xf32>
    %102 = vector.shape_cast %101 : vector<1x4x256xf32> to vector<4x256xf32>
    %103 = vector.shape_cast %100 : vector<4x256xf32> to vector<1x4x256xf32>
    tpu.vector_store %arg8[%c0_63, %c0_64, %c0_65], %103 {strides = array<i32>} : memref<1x4x256xf32, #tpu.memory_space<vmem>>, vector<1x4x256xf32>,
    return
  }
  func.func @transform_0(%arg0: i32) -> (i32, i32, i32) {
    %c0_i32 = arith.constant 0 : i32
    %c0_i32_0 = arith.constant 0 : i32
    %c0_i32_1 = arith.constant 0 : i32
    return %arg0, %c0_i32, %c0_i32_0 : i32, i32, i32
  }
  func.func @transform_1(%arg0: i32) -> (i32, i32) {
    %c0_i32 = arith.constant 0 : i32
    %c0_i32_0 = arith.constant 0 : i32
    %c0_i32_1 = arith.constant 0 : i32
    return %c0_i32, %c0_i32_0 : i32, i32
  }
  func.func @transform_2(%arg0: i32) -> (i32, i32) {
    %c0_i32 = arith.constant 0 : i32
    %c0_i32_0 = arith.constant 0 : i32
    %c0_i32_1 = arith.constant 0 : i32
    return %c0_i32, %c0_i32_0 : i32, i32
  }
  func.func @transform_3(%arg0: i32) -> (i32, i32) {
    %c0_i32 = arith.constant 0 : i32
    %c0_i32_0 = arith.constant 0 : i32
    %c0_i32_1 = arith.constant 0 : i32
    return %c0_i32, %c0_i32_0 : i32, i32
  }
  func.func @transform_4(%arg0: i32) -> (i32, i32) {
    %c0_i32 = arith.constant 0 : i32
    %c0_i32_0 = arith.constant 0 : i32
    %c0_i32_1 = arith.constant 0 : i32
    return %c0_i32, %c0_i32_0 : i32, i32
  }
  func.func @transform_5(%arg0: i32) -> (i32, i32) {
    %c0_i32 = arith.constant 0 : i32
    %c0_i32_0 = arith.constant 0 : i32
    %c0_i32_1 = arith.constant 0 : i32
    return %c0_i32, %c0_i32_0 : i32, i32
  }
  func.func @transform_6(%arg0: i32) -> (i32, i32, i32) {
    %c0_i32 = arith.constant 0 : i32
    %c0_i32_0 = arith.constant 0 : i32
    %c0_i32_1 = arith.constant 0 : i32
    %c0_i32_2 = arith.constant 0 : i32
    return %c0_i32, %c0_i32_0, %c0_i32_1 : i32, i32, i32
  }
  func.func @transform_7(%arg0: i32) -> (i32, i32, i32) {
    %c0_i32 = arith.constant 0 : i32
    %c0_i32_0 = arith.constant 0 : i32
    %c0_i32_1 = arith.constant 0 : i32
    return %arg0, %c0_i32, %c0_i32_0 : i32, i32, i32
  }
}

</mosaic_0001>

<llo_original>
// kernel: tpu_custom_call.1
$region0: #{tpu_custom_call.1}
  #allocation0 [shape = 'u32[]', space=smem, size = 0x4, offset = 0x4, fixed_abs, tag = 'smem constant byte address 0x4 - core index']
  #allocation1 [shape = 'u32[144,128]{1,0:T(1,128)}', space=vmem, size = 0x12000, scoped, tag = 'internal scratch']
  #allocation2 [shape = 'f32[1,1]{1,0:T(1,128)S(1)}', space=vmem, size = 0x200, scoped, tag = 'scoped memory for tpu_custom_call.1']
  %s0 = inlined_call_operand.hbm [shape: f32[2,4,256], index: 0, kind: input, shape index: {}]
  %s1 = inlined_call_operand.vmem [shape: f32[4,36], index: 1, kind: input, shape index: {}]
  %s2 = inlined_call_operand.vmem [shape: f32[4,1], index: 2, kind: input, shape index: {}]
  %s3 = inlined_call_operand.vmem [shape: f32[4,36], index: 3, kind: input, shape index: {}]
  %s4 = inlined_call_operand.vmem [shape: f32[4,1], index: 4, kind: input, shape index: {}]
  %s5 = inlined_call_operand.<no memory space> [shape: f32[1,1], index: 5, kind: input, shape index: {}]
  %s6 = inlined_call_operand.vmem [shape: f32[9,1,256], index: 6, kind: input, shape index: {}]
  %s7 = inlined_call_operand.hbm [shape: f32[2,4,256], index: 7, kind: output, shape index: {}]
  %s8 = sld [smem:[#allocation0]]
  $region65: #{tpu_custom_call.1} parent=0
    _
  %s10 = ssub.s32 1, %s8
  %s11 = scalar_select 0, %s10, %s8
  %v12 = vstv %s5
  %13 = vst [vmem:[#allocation2] sm:$0x1] %v12
  $region1: #{tpu_custom_call.1} parent=0
    #allocation3 [shape = 'u8[8192]{0}', space=vmem, size = 0x2000, scoped, tag = 'input window, operand 0']
    #allocation4 [shape = 's32[2]{0}', space=sflag, size = 0x8, scoped, tag = 'scoped memory for tpu_custom_call.1']
    #allocation5 [shape = 's32[2]{0}', space=sflag, size = 0x8, scoped, tag = 'scoped memory for tpu_custom_call.1']
    #allocation6 [shape = 'u8[8192]{0}', space=vmem, size = 0x2000, scoped, tag = 'output window, operand 0']
    %14 = vsyncpa [#allocation4], 0
    %s15 = scalar_lea.sflag [#allocation4], 1
    %16 = vsyncpa %s15, 0
    %17 = vsyncpa [#allocation5], 0
    %s18 = scalar_lea.sflag [#allocation5], 1
    %19 = vsyncpa %s18, 0
    loop: start=0, step=1, limit=4
    $region2: #{tpu_custom_call.1} parent=1 // loop_pre_header
      _
    $region3: #{tpu_custom_call.1} parent=1 // loop_header
      %s21 = sphi 0, %s25
      %p22 = scmp.ge.s32.totalorder %s21, 4
      %s31 = sphi 0, %s33
      %s34 = sphi 0, %s31
      %s35 = sphi 0, %s34
      %s51 = sphi 0, %s35
      %s55 = sphi 0, %s55
      %s57 = sphi 0, %s55
      %s58 = sphi 0, %s57
      %s72 = sphi 0, %s58
      %s76 = sphi 0, %s76
      %s78 = sphi 0, %s76
      %s79 = sphi 0, %s78
      %s93 = sphi 0, %s79
      %s97 = sphi 0, %s97
      %s99 = sphi 0, %s97
      %s100 = sphi 0, %s99
      %s114 = sphi 0, %s100
      %s118 = sphi 0, %s118
      %s120 = sphi 0, %s118
      %s121 = sphi 0, %s120
      %s135 = sphi 0, %s121
      %s139 = sphi 0, %s139
      %s141 = sphi 0, %s139
      %s142 = sphi 0, %s141
      %s156 = sphi 0, %s142
      %s160 = sphi 0, %s160
      %s162 = sphi 0, %s160
      %s163 = sphi 0, %s162
      %s177 = sphi 0, %s163
      %s183 = sphi 0, %s185
      %s186 = sphi 0, %s183
      %s187 = sphi 0, %s186
      %s203 = sphi 0, %s187
    $region4: #{tpu_custom_call.1} parent=1 // loop_header_branch
      %24 = sbr.rel (%p22) target = $region8
    $region5: #{tpu_custom_call.1} parent=1 // loop_body
      %s26 = ssub.s32 %s21, 1
      %s27 = ssub.s32 %s21, 2
      %s28 = sadd.s32 %s21, 1
      %s29 = ssub.s32 %s21, %s28
      %p30 = scmp.eq.s32.totalorder %s29, 0
      %s32 = sadd.s32 %s31, 1
      %s33 = scalar_select %p30, %s31, %s32
      %p36 = pneg %p30
      %p37 = scmp.eq.s32.totalorder %s21, 1
      %p38 = por %p36, %p37
      %p39 = scmp.ne.s32.totalorder %s31, %s34
      %p40 = scmp.eq.s32.totalorder %s21, 0
      %p41 = por %p39, %p40
      %p42 = scmp.ne.s32.totalorder %s31, %s34
      %p43 = scmp.eq.s32.totalorder %s26, 1
      %p44 = por %p42, %p43
      %p45 = scmp.ne.s32.totalorder %s34, %s35
      %p46 = scmp.eq.s32.totalorder %s26, 0
      %p47 = por %p45, %p46
      %p48 = scmp.ne.s32.totalorder %s34, %s35
      %p49 = scmp.eq.s32.totalorder %s27, 1
      %p50 = por %p48, %p49
      %p52 = scmp.ne.s32.totalorder %s35, %s51
      %p53 = scmp.eq.s32.totalorder %s27, 0
      %p54 = por %p52, %p53
      %s56 = sadd.s32 %s55, 1
      %p59 = scmp.eq.s32.totalorder %s21, 1
      %p60 = scmp.ne.s32.totalorder %s55, %s57
      %p61 = scmp.eq.s32.totalorder %s21, 0
      %p62 = por %p60, %p61
      %p63 = scmp.ne.s32.totalorder %s55, %s57
      %p64 = scmp.eq.s32.totalorder %s26, 1
      %p65 = por %p63, %p64
      %p66 = scmp.ne.s32.totalorder %s57, %s58
      %p67 = scmp.eq.s32.totalorder %s26, 0
      %p68 = por %p66, %p67
      %p69 = scmp.ne.s32.totalorder %s57, %s58
      %p70 = scmp.eq.s32.totalorder %s27, 1
      %p71 = por %p69, %p70
      %p73 = scmp.ne.s32.totalorder %s58, %s72
      %p74 = scmp.eq.s32.totalorder %s27, 0
      %p75 = por %p73, %p74
      %s77 = sadd.s32 %s76, 1
      %p80 = scmp.eq.s32.totalorder %s21, 1
      %p81 = scmp.ne.s32.totalorder %s76, %s78
      %p82 = scmp.eq.s32.totalorder %s21, 0
      %p83 = por %p81, %p82
      %p84 = scmp.ne.s32.totalorder %s76, %s78
      %p85 = scmp.eq.s32.totalorder %s26, 1
      %p86 = por %p84, %p85
      %p87 = scmp.ne.s32.totalorder %s78, %s79
      %p88 = scmp.eq.s32.totalorder %s26, 0
      %p89 = por %p87, %p88
      %p90 = scmp.ne.s32.totalorder %s78, %s79
      %p91 = scmp.eq.s32.totalorder %s27, 1
      %p92 = por %p90, %p91
      %p94 = scmp.ne.s32.totalorder %s79, %s93
      %p95 = scmp.eq.s32.totalorder %s27, 0
      %p96 = por %p94, %p95
      %s98 = sadd.s32 %s97, 1
      %p101 = scmp.eq.s32.totalorder %s21, 1
      %p102 = scmp.ne.s32.totalorder %s97, %s99
      %p103 = scmp.eq.s32.totalorder %s21, 0
      %p104 = por %p102, %p103
      %p105 = scmp.ne.s32.totalorder %s97, %s99
      %p106 = scmp.eq.s32.totalorder %s26, 1
      %p107 = por %p105, %p106
      %p108 = scmp.ne.s32.totalorder %s99, %s100
      %p109 = scmp.eq.s32.totalorder %s26, 0
      %p110 = por %p108, %p109
      %p111 = scmp.ne.s32.totalorder %s99, %s100
      %p112 = scmp.eq.s32.totalorder %s27, 1
      %p113 = por %p111, %p112
      %p115 = scmp.ne.s32.totalorder %s100, %s114
      %p116 = scmp.eq.s32.totalorder %s27, 0
      %p117 = por %p115, %p116
      %s119 = sadd.s32 %s118, 1
      %p122 = scmp.eq.s32.totalorder %s21, 1
      %p123 = scmp.ne.s32.totalorder %s118, %s120
      %p124 = scmp.eq.s32.totalorder %s21, 0
      %p125 = por %p123, %p124
      %p126 = scmp.ne.s32.totalorder %s118, %s120
      %p127 = scmp.eq.s32.totalorder %s26, 1
      %p128 = por %p126, %p127
      %p129 = scmp.ne.s32.totalorder %s120, %s121
      %p130 = scmp.eq.s32.totalorder %s26, 0
      %p131 = por %p129, %p130
      %p132 = scmp.ne.s32.totalorder %s120, %s121
      %p133 = scmp.eq.s32.totalorder %s27, 1
      %p134 = por %p132, %p133
      %p136 = scmp.ne.s32.totalorder %s121, %s135
      %p137 = scmp.eq.s32.totalorder %s27, 0
      %p138 = por %p136, %p137
      %s140 = sadd.s32 %s139, 1
      %p143 = scmp.eq.s32.totalorder %s21, 1
      %p144 = scmp.ne.s32.totalorder %s139, %s141
      %p145 = scmp.eq.s32.totalorder %s21, 0
      %p146 = por %p144, %p145
      %p147 = scmp.ne.s32.totalorder %s139, %s141
      %p148 = scmp.eq.s32.totalorder %s26, 1
      %p149 = por %p147, %p148
      %p150 = scmp.ne.s32.totalorder %s141, %s142
      %p151 = scmp.eq.s32.totalorder %s26, 0
      %p152 = por %p150, %p151
      %p153 = scmp.ne.s32.totalorder %s141, %s142
      %p154 = scmp.eq.s32.totalorder %s27, 1
      %p155 = por %p153, %p154
      %p157 = scmp.ne.s32.totalorder %s142, %s156
      %p158 = scmp.eq.s32.totalorder %s27, 0
      %p159 = por %p157, %p158
      %s161 = sadd.s32 %s160, 1
      %p164 = scmp.eq.s32.totalorder %s21, 1
      %p165 = scmp.ne.s32.totalorder %s160, %s162
      %p166 = scmp.eq.s32.totalorder %s21, 0
      %p167 = por %p165, %p166
      %p168 = scmp.ne.s32.totalorder %s160, %s162
      %p169 = scmp.eq.s32.totalorder %s26, 1
      %p170 = por %p168, %p169
      %p171 = scmp.ne.s32.totalorder %s162, %s163
      %p172 = scmp.eq.s32.totalorder %s26, 0
      %p173 = por %p171, %p172
      %p174 = scmp.ne.s32.totalorder %s162, %s163
      %p175 = scmp.eq.s32.totalorder %s27, 1
      %p176 = por %p174, %p175
      %p178 = scmp.ne.s32.totalorder %s163, %s177
      %p179 = scmp.eq.s32.totalorder %s27, 0
      %p180 = por %p178, %p179
      %s181 = ssub.s32 %s21, %s28
      %p182 = scmp.eq.s32.totalorder %s181, 0
      %s184 = sadd.s32 %s183, 1
      %s185 = scalar_select %p182, %s183, %s184
      %p188 = pneg %p182
      %p189 = scmp.eq.s32.totalorder %s21, 1
      %p190 = por %p188, %p189
      %p191 = scmp.ne.s32.totalorder %s183, %s186
      %p192 = scmp.eq.s32.totalorder %s21, 0
      %p193 = por %p191, %p192
      %p194 = scmp.ne.s32.totalorder %s183, %s186
      %p195 = scmp.eq.s32.totalorder %s26, 1
      %p196 = por %p194, %p195
      %p197 = scmp.ne.s32.totalorder %s186, %s187
      %p198 = scmp.eq.s32.totalorder %s26, 0
      %p199 = por %p197, %p198
      %p200 = scmp.ne.s32.totalorder %s186, %s187
      %p201 = scmp.eq.s32.totalorder %s27, 1
      %p202 = por %p200, %p201
      %p204 = scmp.ne.s32.totalorder %s187, %s203
      %p205 = scmp.eq.s32.totalorder %s27, 0
      %p206 = por %p204, %p205
      %p207 = scmp.le.s32.totalorder 1, %s21
      %p208 = scmp.lt.s32.totalorder %s21, 3
      %p209 = pnand %p207, %p208
      %p210 = pneg %p209
      // Predicated region
      $region9: #{tpu_custom_call.1} parent=5 // pred_check
        _
      $region10: #{tpu_custom_call.1} parent=5 // pred_check_branch
        %212 = sbr.rel (%p209) target = $region12
      $region11: #{tpu_custom_call.1} parent=5 // pred_region
        %s213 = ssub.s32 %s21, 1
        // Predicated region
        $region13: #{tpu_custom_call.1} parent=11 // pred_check
          %p214 = pneg %p68
        $region14: #{tpu_custom_call.1} parent=11 // pred_check_branch
          %216 = sbr.rel (%p214) target = $region16
        $region15: #{tpu_custom_call.1} parent=11 // pred_region
          _
        $region16: #{tpu_custom_call.1} parent=11 // pred_fallthru
          _
        // Predicated region
        $region17: #{tpu_custom_call.1} parent=11 // pred_check
          %p217 = pneg %p89
        $region18: #{tpu_custom_call.1} parent=11 // pred_check_branch
          %219 = sbr.rel (%p217) target = $region20
        $region19: #{tpu_custom_call.1} parent=11 // pred_region
          _
        $region20: #{tpu_custom_call.1} parent=11 // pred_fallthru
          _
        // Predicated region
        $region21: #{tpu_custom_call.1} parent=11 // pred_check
          %p220 = pneg %p110
        $region22: #{tpu_custom_call.1} parent=11 // pred_check_branch
          %222 = sbr.rel (%p220) target = $region24
        $region23: #{tpu_custom_call.1} parent=11 // pred_region
          _
        $region24: #{tpu_custom_call.1} parent=11 // pred_fallthru
          _
        // Predicated region
        $region25: #{tpu_custom_call.1} parent=11 // pred_check
          %p223 = pneg %p131
        $region26: #{tpu_custom_call.1} parent=11 // pred_check_branch
          %225 = sbr.rel (%p223) target = $region28
        $region27: #{tpu_custom_call.1} parent=11 // pred_region
          _
        $region28: #{tpu_custom_call.1} parent=11 // pred_fallthru
          _
        // Predicated region
        $region29: #{tpu_custom_call.1} parent=11 // pred_check
          %p226 = pneg %p152
        $region30: #{tpu_custom_call.1} parent=11 // pred_check_branch
          %228 = sbr.rel (%p226) target = $region32
        $region31: #{tpu_custom_call.1} parent=11 // pred_region
          _
        $region32: #{tpu_custom_call.1} parent=11 // pred_fallthru
          _
        // Predicated region
        $region33: #{tpu_custom_call.1} parent=11 // pred_check
          %p229 = pneg %p173
        $region34: #{tpu_custom_call.1} parent=11 // pred_check_branch
          %231 = sbr.rel (%p229) target = $region36
        $region35: #{tpu_custom_call.1} parent=11 // pred_region
          _
        $region36: #{tpu_custom_call.1} parent=11 // pred_fallthru
          _
      $region12: #{tpu_custom_call.1} parent=5 // pred_fallthru
        _
      %p232 = scmp.lt.s32.totalorder %s21, 2
      // Predicated region
      $region37: #{tpu_custom_call.1} parent=5 // pred_check
        %p233 = pneg %p232
      $region38: #{tpu_custom_call.1} parent=5 // pred_check_branch
        %235 = sbr.rel (%p233) target = $region40
      $region39: #{tpu_custom_call.1} parent=5 // pred_region
        // Predicated region
        $region41: #{tpu_custom_call.1} parent=39 // pred_check
          %p236 = pneg %p41
        $region42: #{tpu_custom_call.1} parent=39 // pred_check_branch
          %238 = sbr.rel (%p236) target = $region44
        $region43: #{tpu_custom_call.1} parent=39 // pred_region
          %s239 = sand.u32 %s31, 1
          %s240 = scalar_lea.sflag [#allocation4], %s239
          %s241 = sand.u32 %s31, 1
          %s242 = smul.addr %s241, 8
          %s243 = scalar_lea.vmem [#allocation3], %s242
          %s245 = ssub.s32 128, 128
          %246 = vsyncadd %s240, %s245
          %s247 = smul.addr %s21, 2
          %s248 = smul.addr %s247, 64
          %s249 = scalar_lea.hbm %s0, %s248
          %s251 = sshll.u32 %s243, 4
          %s252 = int_to_ptr.vmem [resolvable:$true] %s251
          %254 = dma.hbm_to_vmem [thread:$0]  %s249, 128, %s252, %s240
        $region44: #{tpu_custom_call.1} parent=39 // pred_fallthru
          _
      $region40: #{tpu_custom_call.1} parent=5 // pred_fallthru
        _
      %p255 = scmp.le.s32.totalorder 1, %s21
      %p256 = scmp.lt.s32.totalorder %s21, 3
      %p257 = pnand %p255, %p256
      %p258 = pneg %p257
      // Predicated region
      $region45: #{tpu_custom_call.1} parent=5 // pred_check
        _
      $region46: #{tpu_custom_call.1} parent=5 // pred_check_branch
        %260 = sbr.rel (%p257) target = $region48
      $region47: #{tpu_custom_call.1} parent=5 // pred_region
        %s261 = ssub.s32 %s21, 1
        %s262 = sand.u32 %s34, 1
        %s263 = scalar_lea.sflag [#allocation4], %s262
        %s264 = sand.u32 %s34, 1
        %s265 = smul.addr %s264, 8
        %s266 = scalar_lea.vmem [#allocation3], %s265
        // Predicated region
        $region49: #{tpu_custom_call.1} parent=47 // pred_check
          %p267 = pneg %p47
        $region50: #{tpu_custom_call.1} parent=47 // pred_check_branch
          %269 = sbr.rel (%p267) target = $region52
        $region51: #{tpu_custom_call.1} parent=47 // pred_region
          %270 = dma.done %s263, 128
        $region52: #{tpu_custom_call.1} parent=47 // pred_fallthru
          _
        %s271 = sand.u32 %s34, 1
        %s272 = scalar_lea.sflag [#allocation4], %s271
        %s273 = sand.u32 %s34, 1
        %s274 = smul.addr %s273, 8
        %s275 = scalar_lea.vmem [#allocation3], %s274
        %p276 = pneg %p47
        %p277 = pneg %p44
        %p278 = pneg %p68
        %p279 = pneg %p65
        %p280 = pneg %p89
        %p281 = pneg %p86
        %p282 = pneg %p110
        %p283 = pneg %p107
        %p284 = pneg %p131
        %p285 = pneg %p128
        %p286 = pneg %p152
        %p287 = pneg %p149
        %p288 = pneg %p173
        %p289 = pneg %p170
        %p290 = pneg %p199
        %p291 = pneg %p196
        %s292 = sand.u32 %s186, 1
        %s293 = scalar_lea.sflag [#allocation5], %s292
        %s294 = sand.u32 %s186, 1
        %s295 = smul.addr %s294, 8
        %s296 = scalar_lea.vmem [#allocation6], %s295
        %v297 = vld [vmem:[%s1] sm:$0xf]
        %v298 = vld [vmem:[%s2] sm:$0xf]
        %v299 = vld [vmem:[%s3] sm:$0xf]
        %v300 = vld [vmem:[%s4] sm:$0xf]
        %v301 = vld [vmem:[#allocation2] sm:$0x1]
        %v302 = vld [vmem:[%s266] sm:$0xff]
        %v304 = vcombine.high %v302, %v302
        %306 = vrot.lane.b32.xlu0 %v302, 17
        %v307 = vpop.permute.xlu0 %306
        %308 = vrot.lane.b32.xlu0 %v304, 17
        %v309 = vpop.permute.xlu0 %308
        %v310 = vlaneseq
        %v311 = vand.u32 %v310, 127
        %vm312 = vcmp.lt.s32.totalorder %v311, 17
        %v313 = vsel %vm312, %v307, %v309
        %v314 = vsel %vm312, %v309, %v307
        %v315 = vld [vmem:[%s6] sm:$0x3]
        %v317 = vlaneseq
        %v318 = vshrl.u32 %v317, 7
        %v319 = vsub.s32 0, %v318
        %v320 = vrot.slane %v315, %v319
        %v321 = vlaneseq
        %v322 = vshrl.u32 %v321, 7
        %v323 = vsub.s32 1, %v322
        %v324 = vrot.slane %v315, %v323
        %v327 = vmul.f32 %v314, %v320
        %v328 = vmul.f32 %v313, %v324
        %329 = vrot.lane.b32.xlu0 %v302, 16
        %v330 = vpop.permute.xlu0 %329
        %331 = vrot.lane.b32.xlu0 %v304, 16
        %v332 = vpop.permute.xlu0 %331
        %vm333 = vcmp.lt.s32.totalorder %v311, 16
        %v334 = vsel %vm333, %v330, %v332
        %v335 = vsel %vm333, %v332, %v330
        %s336 = scalar_lea.vmem %s6, 2
        %v337 = vld [vmem:[%s336] sm:$0x3]
        %v339 = vlaneseq
        %v340 = vshrl.u32 %v339, 7
        %v341 = vsub.s32 0, %v340
        %v342 = vrot.slane %v337, %v341
        %v343 = vlaneseq
        %v344 = vshrl.u32 %v343, 7
        %v345 = vsub.s32 1, %v344
        %v346 = vrot.slane %v337, %v345
        %v349 = vmul.f32 %v335, %v342
        %v350 = vmul.f32 %v334, %v346
        %351 = vrot.lane.b32.xlu0 %v302, 15
        %v352 = vpop.permute.xlu0 %351
        %353 = vrot.lane.b32.xlu0 %v304, 15
        %v354 = vpop.permute.xlu0 %353
        %vm355 = vcmp.lt.s32.totalorder %v311, 15
        %v356 = vsel %vm355, %v352, %v354
        %v357 = vsel %vm355, %v354, %v352
        %s358 = scalar_lea.vmem %s6, 4
        %v359 = vld [vmem:[%s358] sm:$0x3]
        %v361 = vlaneseq
        %v362 = vshrl.u32 %v361, 7
        %v363 = vsub.s32 0, %v362
        %v364 = vrot.slane %v359, %v363
        %v365 = vlaneseq
        %v366 = vshrl.u32 %v365, 7
        %v367 = vsub.s32 1, %v366
        %v368 = vrot.slane %v359, %v367
        %v371 = vmul.f32 %v357, %v364
        %v372 = vmul.f32 %v356, %v368
        %373 = vrot.lane.b32.xlu0 %v302, 1
        %v374 = vpop.permute.xlu0 %373
        %375 = vrot.lane.b32.xlu0 %v304, 1
        %v376 = vpop.permute.xlu0 %375
        %vm377 = vcmp.lt.s32.totalorder %v311, 1
        %v378 = vsel %vm377, %v374, %v376
        %v379 = vsel %vm377, %v376, %v374
        %s380 = scalar_lea.vmem %s6, 6
        %v381 = vld [vmem:[%s380] sm:$0x3]
        %v383 = vlaneseq
        %v384 = vshrl.u32 %v383, 7
        %v385 = vsub.s32 0, %v384
        %v386 = vrot.slane %v381, %v385
        %v387 = vlaneseq
        %v388 = vshrl.u32 %v387, 7
        %v389 = vsub.s32 1, %v388
        %v390 = vrot.slane %v381, %v389
        %v393 = vmul.f32 %v379, %v386
        %v394 = vmul.f32 %v378, %v390
        %395 = vrot.lane.b32.xlu0 %v302, 127
        %v396 = vpop.permute.xlu0 %395
        %397 = vrot.lane.b32.xlu0 %v304, 127
        %v398 = vpop.permute.xlu0 %397
        %vm399 = vcmp.lt.s32.totalorder %v311, 127
        %v400 = vsel %vm399, %v396, %v398
        %v401 = vsel %vm399, %v398, %v396
        %s402 = scalar_lea.vmem %s6, 10
        %v403 = vld [vmem:[%s402] sm:$0x3]
        %v405 = vlaneseq
        %v406 = vshrl.u32 %v405, 7
        %v407 = vsub.s32 0, %v406
        %v408 = vrot.slane %v403, %v407
        %v409 = vlaneseq
        %v410 = vshrl.u32 %v409, 7
        %v411 = vsub.s32 1, %v410
        %v412 = vrot.slane %v403, %v411
        %v415 = vmul.f32 %v400, %v408
        %v416 = vmul.f32 %v401, %v412
        %417 = vrot.lane.b32.xlu0 %v302, 113
        %v418 = vpop.permute.xlu0 %417
        %419 = vrot.lane.b32.xlu0 %v304, 113
        %v420 = vpop.permute.xlu0 %419
        %vm421 = vcmp.lt.s32.totalorder %v311, 113
        %v422 = vsel %vm421, %v418, %v420
        %v423 = vsel %vm421, %v420, %v418
        %s424 = scalar_lea.vmem %s6, 12
        %v425 = vld [vmem:[%s424] sm:$0x3]
        %v427 = vlaneseq
        %v428 = vshrl.u32 %v427, 7
        %v429 = vsub.s32 0, %v428
        %v430 = vrot.slane %v425, %v429
        %v431 = vlaneseq
        %v432 = vshrl.u32 %v431, 7
        %v433 = vsub.s32 1, %v432
        %v434 = vrot.slane %v425, %v433
        %v437 = vmul.f32 %v422, %v430
        %v438 = vmul.f32 %v423, %v434
        %439 = vrot.lane.b32.xlu0 %v302, 112
        %v440 = vpop.permute.xlu0 %439
        %441 = vrot.lane.b32.xlu0 %v304, 112
        %v442 = vpop.permute.xlu0 %441
        %vm443 = vcmp.lt.s32.totalorder %v311, 112
        %v444 = vsel %vm443, %v440, %v442
        %v445 = vsel %vm443, %v442, %v440
        %s446 = scalar_lea.vmem %s6, 14
        %v447 = vld [vmem:[%s446] sm:$0x3]
        %v449 = vlaneseq
        %v450 = vshrl.u32 %v449, 7
        %v451 = vsub.s32 0, %v450
        %v452 = vrot.slane %v447, %v451
        %v453 = vlaneseq
        %v454 = vshrl.u32 %v453, 7
        %v455 = vsub.s32 1, %v454
        %v456 = vrot.slane %v447, %v455
        %v459 = vmul.f32 %v444, %v452
        %v460 = vmul.f32 %v445, %v456
        %461 = vrot.lane.b32.xlu0 %v302, 111
        %v462 = vpop.permute.xlu0 %461
        %463 = vrot.lane.b32.xlu0 %v304, 111
        %v464 = vpop.permute.xlu0 %463
        %vm465 = vcmp.lt.s32.totalorder %v311, 111
        %v466 = vsel %vm465, %v462, %v464
        %v467 = vsel %vm465, %v464, %v462
        %s468 = scalar_lea.vmem %s6, 16
        %v469 = vld [vmem:[%s468] sm:$0x3]
        %v471 = vlaneseq
        %v472 = vshrl.u32 %v471, 7
        %v473 = vsub.s32 0, %v472
        %v474 = vrot.slane %v469, %v473
        %v475 = vlaneseq
        %v476 = vshrl.u32 %v475, 7
        %v477 = vsub.s32 1, %v476
        %v478 = vrot.slane %v469, %v477
        %v481 = vmul.f32 %v466, %v474
        %v482 = vmul.f32 %v467, %v478
        %v485 = vrot.slane %v349, 4
        %v486 = vrot.slane %v350, 4
        %v491 = vrot.slane %v393, 4
        %v492 = vrot.slane %v394, 4
        %v497 = vrot.slane %v415, 4
        %v498 = vrot.slane %v416, 4
        %v503 = vrot.slane %v459, 4
        %v504 = vrot.slane %v460, 4
        %vm507 = vcmask 1043456
        %v508 = vsel %vm507, %v327, %v485
        %v509 = vsel %vm507, %v328, %v486
        %v510 = vsel %vm507, %v371, %v491
        %v511 = vsel %vm507, %v372, %v492
        %v512 = vsel %vm507, %v302, %v497
        %v513 = vsel %vm507, %v304, %v498
        %v514 = vsel %vm507, %v437, %v503
        %v515 = vsel %vm507, %v438, %v504
        %517 = vset.pattern.permute.xlu0 0
        %518 = vperm.xlu0 %517, %v298
        %v519 = vpop.permute.xlu0 %518
        %vm521 = vcmask 293888
        %v523 = vsel %vm521, %v297, 0
        %v526 = vsel %vm507, %v481, 0
        %v529 = vsel %vm507, %v482, 0
        %531 = vmatprep.subr.mxu0 %v509
        %532 = vmatpush1.msra.mxu0 %v508
        %533 = vmatprep.subr.mxu0 %v511
        %534 = vmatpush1.msra.mxu0 %v510
        %535 = vmatprep.subr.mxu0 %v513
        %536 = vmatpush1.msra.mxu0 %v512
        %537 = vmatprep.subr.mxu0 %v515
        %538 = vmatpush1.msra.mxu0 %v514
        %539 = vmatprep.subr.mxu0 %v529
        %540 = vmatpush1.msra.mxu0 %v526
        %541 = vmatprep.subr.mxu0 0.0
        %542 = vmatpush1.msra.mxu0 0.0
        %543 = vmatprep.subr.mxu0 0.0
        %544 = vmatpush1.msra.mxu0 0.0
        %545 = vmatprep.subr.mxu0 0.0
        %546 = vmatpush1.msra.mxu0 0.0
        %547 = vmatprep.subr.mxu0 0.0
        %548 = vmatpush1.msra.mxu0 0.0
        %549 = vmatprep.subr.mxu0 0.0
        %550 = vmatpush1.msra.mxu0 0.0
        %551 = vmatprep.subr.mxu0 0.0
        %552 = vmatpush1.msra.mxu0 0.0
        %553 = vmatprep.subr.mxu0 0.0
        %554 = vmatpush1.msra.mxu0 0.0
        %555 = vmatprep.subr.mxu0 0.0
        %556 = vmatpush1.msra.mxu0 0.0
        %557 = vmatprep.subr.mxu0 0.0
        %558 = vmatpush1.msra.mxu0 0.0
        %559 = vmatprep.subr.mxu0 0.0
        %560 = vmatpush1.msra.mxu0 0.0
        %561 = vmatprep.subr.mxu0 0.0
        %562 = vmatpush1.msra.mxu0 0.0
        %563 = vmatprep.subr.mxu0 0.0
        %564 = vmatpush1.msra.mxu0 0.0
        %565 = vmatprep.subr.mxu0 0.0
        %566 = vmatpush1.msra.mxu0 0.0
        %567 = vmatprep.subr.mxu0 0.0
        %568 = vmatpush1.msra.mxu0 0.0
        %569 = vmatprep.subr.mxu0 0.0
        %570 = vmatpush1.msra.mxu0 0.0
        %571 = vmatprep.subr.mxu0 0.0
        %572 = vmatpush1.msra.mxu0 0.0
        %573 = vmatprep.subr.mxu0 0.0
        %574 = vmatpush1.msra.mxu0 0.0
        %575 = vmatprep.subr.mxu0 0.0
        %576 = vmatpush1.msra.mxu0 0.0
        %577 = vmatprep.subr.mxu0 0.0
        %578 = vmatpush1.msra.mxu0 0.0
        %579 = vmatprep.subr.mxu0 0.0
        %580 = vmatpush1.msra.mxu0 0.0
        %581 = vmatprep.subr.mxu0 0.0
        %582 = vmatpush1.msra.mxu0 0.0
        %583 = vmatprep.subr.mxu0 0.0
        %584 = vmatpush1.msra.mxu0 0.0
        %585 = vmatprep.subr.mxu0 0.0
        %586 = vmatpush1.msra.mxu0 0.0
        %587 = vmatprep.subr.mxu0 0.0
        %588 = vmatpush1.msra.mxu0 0.0
        %589 = vmatprep.subr.mxu0 0.0
        %590 = vmatpush1.msra.mxu0 0.0
        %591 = vmatprep.subr.mxu0 0.0
        %592 = vmatpush1.msra.mxu0 0.0
        %593 = vmatprep.subr.mxu0 0.0
        %594 = vmatpush1.msra.mxu0 0.0
        %595 = vmatprep.mubr.f32.mxu0 0.0
        %596 = vmatmul.mubr.f32.gmra.mrb[0].mxu0 %v523
        %v597 = vpop.f32.mrb[0].mxu0
        %v598 = vadd.f32 %v519, %v597
        %v599 = vpop.f32.mrb[0].mxu0
        %v600 = vadd.f32 %v519, %v599
        %601 = vdwg.mxu0
        %vm602 = vcmp.gt.f32.partialorder %v598, 0.0
        %vm603 = vcmp.gt.f32.partialorder %v600, 0.0
        %v605 = vlaneseq
        %v606 = vshrl.u32 %v605, 7
        %v607 = vsub.s32 0, %v606
        %v608 = vrot.slane %v301, %v607
        %609 = vset.pattern.permute.xlu0 0
        %610 = vperm.xlu0 %609, %v608
        %v611 = vpop.permute.xlu0 %610
        %v613 = vmul.f32 %v611, %v598
        %v614 = vmul.f32 %v611, %v600
        %v615 = vsel %vm602, %v598, %v613
        %v616 = vsel %vm603, %v600, %v614
        %617 = vrot.lane.b32.xlu0 %v615, 17
        %v618 = vpop.permute.xlu0 %617
        %619 = vrot.lane.b32.xlu0 %v616, 17
        %v620 = vpop.permute.xlu0 %619
        %v621 = vsel %vm312, %v618, %v620
        %v622 = vsel %vm312, %v620, %v618
        %v623 = vmul.f32 %v622, %v320
        %v624 = vmul.f32 %v621, %v324
        %625 = vrot.lane.b32.xlu0 %v615, 16
        %v626 = vpop.permute.xlu0 %625
        %627 = vrot.lane.b32.xlu0 %v616, 16
        %v628 = vpop.permute.xlu0 %627
        %v629 = vsel %vm333, %v626, %v628
        %v630 = vsel %vm333, %v628, %v626
        %v631 = vmul.f32 %v630, %v342
        %v632 = vmul.f32 %v629, %v346
        %633 = vrot.lane.b32.xlu0 %v615, 15
        %v634 = vpop.permute.xlu0 %633
        %635 = vrot.lane.b32.xlu0 %v616, 15
        %v636 = vpop.permute.xlu0 %635
        %v637 = vsel %vm355, %v634, %v636
        %v638 = vsel %vm355, %v636, %v634
        %v639 = vmul.f32 %v638, %v364
        %v640 = vmul.f32 %v637, %v368
        %641 = vrot.lane.b32.xlu0 %v615, 1
        %v642 = vpop.permute.xlu0 %641
        %643 = vrot.lane.b32.xlu0 %v616, 1
        %v644 = vpop.permute.xlu0 %643
        %v645 = vsel %vm377, %v642, %v644
        %v646 = vsel %vm377, %v644, %v642
        %v647 = vmul.f32 %v646, %v386
        %v648 = vmul.f32 %v645, %v390
        %649 = vrot.lane.b32.xlu0 %v615, 127
        %v650 = vpop.permute.xlu0 %649
        %651 = vrot.lane.b32.xlu0 %v616, 127
        %v652 = vpop.permute.xlu0 %651
        %v653 = vsel %vm399, %v650, %v652
        %v654 = vsel %vm399, %v652, %v650
        %v655 = vmul.f32 %v653, %v408
        %v656 = vmul.f32 %v654, %v412
        %657 = vrot.lane.b32.xlu0 %v615, 113
        %v658 = vpop.permute.xlu0 %657
        %659 = vrot.lane.b32.xlu0 %v616, 113
        %v660 = vpop.permute.xlu0 %659
        %v661 = vsel %vm421, %v658, %v660
        %v662 = vsel %vm421, %v660, %v658
        %v663 = vmul.f32 %v661, %v430
        %v664 = vmul.f32 %v662, %v434
        %665 = vrot.lane.b32.xlu0 %v615, 112
        %v666 = vpop.permute.xlu0 %665
        %667 = vrot.lane.b32.xlu0 %v616, 112
        %v668 = vpop.permute.xlu0 %667
        %v669 = vsel %vm443, %v666, %v668
        %v670 = vsel %vm443, %v668, %v666
        %v671 = vmul.f32 %v669, %v452
        %v672 = vmul.f32 %v670, %v456
        %673 = vrot.lane.b32.xlu0 %v615, 111
        %v674 = vpop.permute.xlu0 %673
        %675 = vrot.lane.b32.xlu0 %v616, 111
        %v676 = vpop.permute.xlu0 %675
        %v677 = vsel %vm465, %v674, %v676
        %v678 = vsel %vm465, %v676, %v674
        %v679 = vmul.f32 %v677, %v474
        %v680 = vmul.f32 %v678, %v478
        %v683 = vrot.slane %v631, 4
        %v684 = vrot.slane %v632, 4
        %v689 = vrot.slane %v647, 4
        %v690 = vrot.slane %v648, 4
        %v695 = vrot.slane %v655, 4
        %v696 = vrot.slane %v656, 4
        %v701 = vrot.slane %v671, 4
        %v702 = vrot.slane %v672, 4
        %v705 = vsel %vm507, %v623, %v683
        %v706 = vsel %vm507, %v624, %v684
        %v707 = vsel %vm507, %v639, %v689
        %v708 = vsel %vm507, %v640, %v690
        %v709 = vsel %vm507, %v615, %v695
        %v710 = vsel %vm507, %v616, %v696
        %v711 = vsel %vm507, %v663, %v701
        %v712 = vsel %vm507, %v664, %v702
        %714 = vset.pattern.permute.xlu0 0
        %715 = vperm.xlu0 %714, %v300
        %v716 = vpop.permute.xlu0 %715
        %v719 = vsel %vm521, %v299, 0
        %v722 = vsel %vm507, %v679, 0
        %v725 = vsel %vm507, %v680, 0
        %727 = vmatprep.subr.mxu0 %v706
        %728 = vmatpush1.msra.mxu0 %v705
        %729 = vmatprep.subr.mxu0 %v708
        %730 = vmatpush1.msra.mxu0 %v707
        %731 = vmatprep.subr.mxu0 %v710
        %732 = vmatpush1.msra.mxu0 %v709
        %733 = vmatprep.subr.mxu0 %v712
        %734 = vmatpush1.msra.mxu0 %v711
        %735 = vmatprep.subr.mxu0 %v725
        %736 = vmatpush1.msra.mxu0 %v722
        %737 = vmatprep.subr.mxu0 0.0
        %738 = vmatpush1.msra.mxu0 0.0
        %739 = vmatprep.subr.mxu0 0.0
        %740 = vmatpush1.msra.mxu0 0.0
        %741 = vmatprep.subr.mxu0 0.0
        %742 = vmatpush1.msra.mxu0 0.0
        %743 = vmatprep.subr.mxu0 0.0
        %744 = vmatpush1.msra.mxu0 0.0
        %745 = vmatprep.subr.mxu0 0.0
        %746 = vmatpush1.msra.mxu0 0.0
        %747 = vmatprep.subr.mxu0 0.0
        %748 = vmatpush1.msra.mxu0 0.0
        %749 = vmatprep.subr.mxu0 0.0
        %750 = vmatpush1.msra.mxu0 0.0
        %751 = vmatprep.subr.mxu0 0.0
        %752 = vmatpush1.msra.mxu0 0.0
        %753 = vmatprep.subr.mxu0 0.0
        %754 = vmatpush1.msra.mxu0 0.0
        %755 = vmatprep.subr.mxu0 0.0
        %756 = vmatpush1.msra.mxu0 0.0
        %757 = vmatprep.subr.mxu0 0.0
        %758 = vmatpush1.msra.mxu0 0.0
        %759 = vmatprep.subr.mxu0 0.0
        %760 = vmatpush1.msra.mxu0 0.0
        %761 = vmatprep.subr.mxu0 0.0
        %762 = vmatpush1.msra.mxu0 0.0
        %763 = vmatprep.subr.mxu0 0.0
        %764 = vmatpush1.msra.mxu0 0.0
        %765 = vmatprep.subr.mxu0 0.0
        %766 = vmatpush1.msra.mxu0 0.0
        %767 = vmatprep.subr.mxu0 0.0
        %768 = vmatpush1.msra.mxu0 0.0
        %769 = vmatprep.subr.mxu0 0.0
        %770 = vmatpush1.msra.mxu0 0.0
        %771 = vmatprep.subr.mxu0 0.0
        %772 = vmatpush1.msra.mxu0 0.0
        %773 = vmatprep.subr.mxu0 0.0
        %774 = vmatpush1.msra.mxu0 0.0
        %775 = vmatprep.subr.mxu0 0.0
        %776 = vmatpush1.msra.mxu0 0.0
        %777 = vmatprep.subr.mxu0 0.0
        %778 = vmatpush1.msra.mxu0 0.0
        %779 = vmatprep.subr.mxu0 0.0
        %780 = vmatpush1.msra.mxu0 0.0
        %781 = vmatprep.subr.mxu0 0.0
        %782 = vmatpush1.msra.mxu0 0.0
        %783 = vmatprep.subr.mxu0 0.0
        %784 = vmatpush1.msra.mxu0 0.0
        %785 = vmatprep.subr.mxu0 0.0
        %786 = vmatpush1.msra.mxu0 0.0
        %787 = vmatprep.subr.mxu0 0.0
        %788 = vmatpush1.msra.mxu0 0.0
        %789 = vmatprep.subr.mxu0 0.0
        %790 = vmatpush1.msra.mxu0 0.0
        %791 = vmatprep.mubr.f32.mxu0 0.0
        %792 = vmatmul.mubr.f32.gmra.mrb[0].mxu0 %v719
        %v793 = vpop.f32.mrb[0].mxu0
        %v794 = vadd.f32 %v716, %v793
        %v795 = vpop.f32.mrb[0].mxu0
        %v796 = vadd.f32 %v716, %v795
        %797 = vdwg.mxu0
        %v798 = vadd.f32 %v794, %v302
        %v799 = vadd.f32 %v796, %v304
        %v802 = vcombine.low %v798, %v799
        %804 = vst [vmem:[%s296] sm:$0xff] %v802
        %s805 = sand.u32 %s186, 1
        %s806 = scalar_lea.sflag [#allocation5], %s805
        %s807 = sand.u32 %s186, 1
        %s808 = smul.addr %s807, 8
        %s809 = scalar_lea.vmem [#allocation6], %s808
        // Predicated region
        $region53: #{tpu_custom_call.1} parent=47 // pred_check
          %p810 = pneg %p196
        $region54: #{tpu_custom_call.1} parent=47 // pred_check_branch
          %812 = sbr.rel (%p810) target = $region56
        $region55: #{tpu_custom_call.1} parent=47 // pred_region
          %s814 = ssub.s32 128, 128
          %815 = vsyncadd %s806, %s814
          %s816 = smul.addr %s26, 2
          %s817 = smul.addr %s816, 64
          %s818 = scalar_lea.hbm %s7, %s817
          %s820 = sshll.u32 %s809, 4
          %s821 = int_to_ptr.vmem [resolvable:$true] %s820
          %823 = dma.vmem_to_hbm [thread:$0]  %s821, 128, %s818, %s806
        $region56: #{tpu_custom_call.1} parent=47 // pred_fallthru
          _
      $region48: #{tpu_custom_call.1} parent=5 // pred_fallthru
        _
      %p824 = scmp.le.s32.totalorder 2, %s21
      // Predicated region
      $region57: #{tpu_custom_call.1} parent=5 // pred_check
        %p825 = pneg %p824
      $region58: #{tpu_custom_call.1} parent=5 // pred_check_branch
        %827 = sbr.rel (%p825) target = $region60
      $region59: #{tpu_custom_call.1} parent=5 // pred_region
        %s828 = ssub.s32 %s21, 2
        // Predicated region
        $region61: #{tpu_custom_call.1} parent=59 // pred_check
          %p829 = pneg %p202
        $region62: #{tpu_custom_call.1} parent=59 // pred_check_branch
          %831 = sbr.rel (%p829) target = $region64
        $region63: #{tpu_custom_call.1} parent=59 // pred_region
          %s832 = sand.u32 %s187, 1
          %s833 = scalar_lea.sflag [#allocation5], %s832
          %s834 = sand.u32 %s187, 1
          %s835 = smul.addr %s834, 8
          %s836 = scalar_lea.vmem [#allocation6], %s835
          %837 = dma.done %s833, 128
        $region64: #{tpu_custom_call.1} parent=59 // pred_fallthru
          _
      $region60: #{tpu_custom_call.1} parent=5 // pred_fallthru
        _
    $region6: #{tpu_custom_call.1} parent=1 // loop_footer
      %s25 = sadd.s32 1, %s21
    $region7: #{tpu_custom_call.1} parent=1 // loop_footer_branch
      %20 = sbr.rel target = $region3
    $region8: #{tpu_custom_call.1} parent=1 // loop_exit
      _
    %838 = vsyncpa [#allocation4], 1
    %s839 = scalar_lea.sflag [#allocation4], 1
    %840 = vsyncpa %s839, 1
    %841 = vsyncpa [#allocation5], 1
    %s842 = scalar_lea.sflag [#allocation5], 1
    %843 = vsyncpa %s842, 1

</llo_original>
